<compile_context>
chip_gen: v7x
topology: tpu7x:2x2x1
jax: 0.10.0
libtpu: 0.0.40
codegen_flags: <defaults>
</compile_context>

<pallas_src>
import math

import jax
import jax.numpy as jnp
from jax import lax
from jax.experimental import pallas as pl
from jax.experimental.pallas import tpu as pltpu

K2 = 15          # conv2 kernel size
PAD2 = 7         # conv2 padding (conv_15 is called with padding=7 -> "same")


def identity_block_kernel(x_ref, w1_ref, w2_ref, w3c_ref,
                          b1_ref, b2_ref, b3c_ref, o_ref):
    """One batch tile per grid step, channel-major (L in lanes).

    x_ref  : (B, Cin, L)    bf16, PyTorch layout
    w1_ref : (Cr, Cin)      bf16, conv1 weights, BN1 scale folded
    w2_ref : (Cr, K2*Cr)    bf16, conv2 im2col weights (k-major), BN2 folded
    w3c_ref: (Ce, Cr+Cin)   bf16, [conv3 | shortcut] weights, BN3/BNsc folded
    b1_ref : (Cr, 1) f32    BN1 shift
    b2_ref : (Cr, 1) f32    BN2 shift
    b3c_ref: (Ce, 1) f32    BN3 shift + BNsc shift (pre-summed)
    o_ref  : (B, Ce, L)     f32
    """
    B, Cin, L = x_ref.shape
    Cr = w1_ref.shape[0]

    # Hoisted loads / constants (JAX does not CSE these across loop iterations).
    w1 = w1_ref[...]
    w2 = w2_ref[...]
    w3c = w3c_ref[...]
    b1 = b1_ref[...]
    b2 = b2_ref[...]
    b3c = b3c_ref[...]
    zpad = jnp.zeros((Cr, PAD2), jnp.bfloat16)

    for b in range(B):                       # static unrolled batch-tile loop
        xb = x_ref[b]                        # (Cin, L) bf16

        # ---- conv1 (1x1) + bn1 + relu : (Cr, Cin) @ (Cin, L) -> (Cr, L)
        h = jnp.dot(w1, xb, preferred_element_type=jnp.float32)
        h = jnp.maximum(h + b1, 0.0)

        # ---- conv2 (k=15, pad=7, "same") as ONE bf16 im2col matmul + bn2 + relu
        hb = h.astype(jnp.bfloat16)
        hp = jnp.concatenate([zpad, hb, zpad], axis=1)              # (Cr, L+14)
        cols = jnp.concatenate([hp[:, k:k + L] for k in range(K2)],
                               axis=0)                              # (K2*Cr, L)
        h2 = jnp.dot(w2, cols, preferred_element_type=jnp.float32)  # (Cr, L)
        h2 = jnp.maximum(h2 + b2, 0.0)

        # ---- conv3 + bn3 fused with shortcut conv + bn_sc:
        #      [w3 | wsc] @ [h2 ; x] + (b3 + bsc), then residual-ReLU
        cat = jnp.concatenate([h2.astype(jnp.bfloat16), xb], axis=0)  # (Cr+Cin, L)
        y = jnp.dot(w3c, cat, preferred_element_type=jnp.float32) + b3c
        o_ref[b] = jnp.maximum(y, 0.0).astype(o_ref.dtype)            # (Ce, L)


# ---------------------------------------------------------------------------
# VMEM / tiling heuristics (generation-aware)
# ---------------------------------------------------------------------------

def _tpu_vmem_capacity_bytes():
    try:
        cap = getattr(pltpu.get_tpu_info(), "vmem_capacity_bytes", None)
        if cap:
            return int(cap)
    except Exception:
        pass
    return 128 << 20          # v5e / v6e default; v7x reports 64 MiB


def _per_elem_vmem_bytes(Cin, Cr, Ce, L):
    """Per-batch-element VMEM footprint (bytes), including the im2col temp."""
    x_blk = 2 * Cin * L                         # bf16 input block
    out_blk = 4 * Ce * L                        # f32 output block
    temps = (6 * Cr * L                         # h (f32 + bf16 copy)
             + 2 * Cr * (L + 2 * PAD2)          # padded h (bf16)
             + 2 * K2 * Cr * L                  # bf16 im2col cols
             + 6 * Cr * L                       # h2 (f32 + bf16 copy)
             + 2 * (Cr + Cin) * L               # [h2 ; x] concat (bf16)
             + 4 * Ce * L)                      # y (f32)
    return 2 * (x_blk + out_blk) + temps        # x/out are double-buffered


def _weight_vmem_bytes(Cin, Cr, Ce):
    w = 2 * (Cr * Cin + K2 * Cr * Cr + Ce * (Cr + Cin))   # bf16 weights
    b = 4 * (2 * Cr + Ce)                                 # f32 shifts
    return 2 * (w + b)                                    # double-buffered


def _pick_batch_tile(N, Cin, Cr, Ce, L, budget_bytes):
    per_elem = _per_elem_vmem_bytes(Cin, Cr, Ce, L)
    max_tile = max(1, budget_bytes // max(per_elem, 1))
    if N >= 2:
        max_tile = min(max_tile, N // 2)        # >= 2 grid steps (v7x: 2 TCs)
    max_tile = min(max_tile, 16)                # bound in-kernel unroll
    best = 1
    for b in range(1, N + 1):
        if N % b or b > max_tile:
            continue
        best = b
        if b * L >= 1024:                       # enough lanes of work per step
            break
    return best


def _vmem_limit_bytes(batch_tile, Cin, Cr, Ce, L, capacity):
    need = (batch_tile * _per_elem_vmem_bytes(Cin, Cr, Ce, L)
            + _weight_vmem_bytes(Cin, Cr, Ce)
            + (1 << 20))                        # slack
    cap = int(0.75 * capacity)
    if need > cap:
        raise ValueError(
            f"IdentityBlock tile does not fit VMEM: need ~{need >> 20} MiB, "
            f"cap {cap >> 20} MiB. Reduce batch_tile or add L tiling.")
    return int(min(max(need, 16 << 20), cap))


# ---------------------------------------------------------------------------
# Wrapper
# ---------------------------------------------------------------------------

def identity_block(x_ncl, params, *, batch_tile=None):
    """x_ncl: (N, Cin, L), PyTorch Conv1d layout. Returns (N, Ce, L) float32."""
    x_ncl = x_ncl.astype(jnp.bfloat16)          # bf16 DMA; matmuls are bf16 anyway
    N, Cin, L = x_ncl.shape
    Cr = params["w1"].shape[0]
    Ce = params["w3cat"].shape[0]

    capacity = _tpu_vmem_capacity_bytes()
    if batch_tile is None:
        batch_tile = _pick_batch_tile(N, Cin, Cr, Ce, L, capacity // 4)
    assert N % batch_tile == 0, "batch_tile must divide N"
    grid = (N // batch_tile,)

    return pl.pallas_call(
        identity_block_kernel,
        out_shape=jax.ShapeDtypeStruct((N, Ce, L), jnp.float32),
        grid_spec=pltpu.PrefetchScalarGridSpec(
            num_scalar_prefetch=0,
            grid=grid,
            in_specs=[
                pl.BlockSpec((batch_tile, Cin, L), lambda n: (n, 0, 0)),   # x
                pl.BlockSpec((Cr, Cin), lambda n: (0, 0)),                 # w1
                pl.BlockSpec((Cr, K2 * Cr), lambda n: (0, 0)),             # w2
                pl.BlockSpec((Ce, Cr + Cin), lambda n: (0, 0)),            # [w3|wsc]
                pl.BlockSpec((Cr, 1), lambda n: (0, 0)),                   # bn1 shift
                pl.BlockSpec((Cr, 1), lambda n: (0, 0)),                   # bn2 shift
                pl.BlockSpec((Ce, 1), lambda n: (0, 0)),                   # bn3+bnsc shift
            ],
            out_specs=pl.BlockSpec((batch_tile, Ce, L), lambda n: (n, 0, 0)),
        ),
        compiler_params=pltpu.CompilerParams(
            dimension_semantics=("parallel",),
            vmem_limit_bytes=_vmem_limit_bytes(batch_tile, Cin, Cr, Ce, L,
                                               capacity),
        ),
    )(x_ncl, params["w1"], params["w2"], params["w3cat"],
      params["bn1b"], params["bn2b"], params["bn3cat"])


# ---------------------------------------------------------------------------
# Parameters (synthetic, matching the PyTorch module's shapes) + reference
# ---------------------------------------------------------------------------

def init_params(key, Cin, Cr, Ce, eps=1e-5):
    """Eval-mode BatchNorm scales folded into the (Cout, Cin) bf16 weights;
    only per-channel shifts kept as f32 biases.  conv3 and shortcut weights
    are stacked along the contraction axis; their shifts are pre-summed."""
    ks = jax.random.split(key, 20)

    def conv_w(k, co, ci, ksz):
        bound = 1.0 / math.sqrt(ci * ksz)             # PyTorch default init range
        return jax.random.uniform(k, (co, ci, ksz), jnp.float32, -bound, bound)

    w1 = conv_w(ks[0], Cr, Cin, 1)                    # conv1:    (Cr, Cin, 1)
    w2 = conv_w(ks[1], Cr, Cr, K2)                    # conv2:    (Cr, Cr, 15)
    w3 = conv_w(ks[2], Ce, Cr, 1)                     # conv3:    (Ce, Cr, 1)
    wsc = conv_w(ks[3], Ce, Cin, 1)                   # shortcut: (Ce, Cin, 1)

    def bn_fold(kg, kb, km, kv, c):
        gamma = jax.random.uniform(kg, (c,), jnp.float32, 0.5, 1.5)
        beta = 0.1 * jax.random.normal(kb, (c,), jnp.float32)
        mean = 0.1 * jax.random.normal(km, (c,), jnp.float32)
        var = jax.random.uniform(kv, (c,), jnp.float32, 0.5, 1.5)
        scale = gamma / jnp.sqrt(var + eps)
        shift = beta - mean * scale
        return scale, shift

    s1, b1 = bn_fold(*ks[4:8], Cr)
    s2, b2 = bn_fold(*ks[8:12], Cr)
    s3, b3 = bn_fold(*ks[12:16], Ce)
    ssc, bsc = bn_fold(*ks[16:20], Ce)

    w1m = (w1[:, :, 0] * s1[:, None]).astype(jnp.bfloat16)               # (Cr, Cin)
    # conv2 im2col weights: column index = k*Cr + ci  (matches kernel's cols)
    w2m = (jnp.transpose(w2 * s2[:, None, None], (0, 2, 1))
           .reshape(Cr, K2 * Cr).astype(jnp.bfloat16))                   # (Cr, K2*Cr)
    w3m = (w3[:, :, 0] * s3[:, None]).astype(jnp.bfloat16)               # (Ce, Cr)
    wscm = (wsc[:, :, 0] * ssc[:, None]).astype(jnp.bfloat16)            # (Ce, Cin)
    w3cat = jnp.concatenate([w3m, wscm], axis=1)                         # (Ce, Cr+Cin)

    return dict(
        w1=w1m, w2=w2m, w3cat=w3cat,
        bn1b=b1.reshape(Cr, 1), bn2b=b2.reshape(Cr, 1),
        bn3cat=(b3 + bsc).reshape(Ce, 1),
    )


def reference(x_ncl, params):
    """Pure-JAX reference built from lax.conv_general_dilated (independent of
    the kernel's im2col layout), same folded weights, bf16 inputs / f32 acc."""
    f32 = jnp.float32
    x = x_ncl.astype(jnp.bfloat16)                    # (N, Cin, L)
    Cr = params["w1"].shape[0]

    def conv(inp, w, pad):
        return lax.conv_general_dilated(
            inp, w, window_strides=(1,), padding=[(pad, pad)],
            dimension_numbers=("NCH", "OIH", "NCH"),
            preferred_element_type=f32)

    w1 = params["w1"][:, :, None]                                        # (Cr, Cin, 1)
    w2 = jnp.transpose(params["w2"].reshape(Cr, K2, Cr), (0, 2, 1))      # (Cr, Cr, 15)
    w3 = params["w3cat"][:, :Cr][:, :, None]                             # (Ce, Cr, 1)
    wsc = params["w3cat"][:, Cr:][:, :, None]                            # (Ce, Cin, 1)

    h = jnp.maximum(conv(x, w1, 0) + params["bn1b"][None], 0.0)
    h = jnp.maximum(conv(h.astype(jnp.bfloat16), w2, PAD2)
                    + params["bn2b"][None], 0.0)
    y = conv(h.astype(jnp.bfloat16), w3, 0)
    r = conv(x, wsc, 0)
    return jnp.maximum(y + r + params["bn3cat"][None], 0.0)              # (N, Ce, L)


if __name__ == "__main__":
    key = jax.random.PRNGKey(0)
    kx, kp = jax.random.split(key)

    # IdentityBlock(in_channels=8, reduced_channels=4, expanded_channels=16)
    N, Cin, Cr, Ce, L = 2, 8, 4, 16, 16
    x = jax.random.normal(kx, (N, Cin, L), jnp.float32)
    params = init_params(kp, Cin, Cr, Ce)

    out = jax.block_until_ready(identity_block(x, params))
    ref = reference(x, params)

    assert out.shape == (N, Ce, L)
    assert jnp.allclose(out, ref, atol=2e-3, rtol=2e-3), \
        "Pallas kernel mismatch vs reference"

    print("KERNEL_OK")
</pallas_src>

<mosaic_0001>
module attributes {stable_mosaic.version = 11 : i64} {
  func.func @identity_block_kernel(%arg0: i32, %arg1: memref<1x8x16xbf16, #tpu.memory_space<vmem>>, %arg2: memref<4x8xbf16, #tpu.memory_space<vmem>>, %arg3: memref<4x60xbf16, #tpu.memory_space<vmem>>, %arg4: memref<16x12xbf16, #tpu.memory_space<vmem>>, %arg5: memref<4x1xf32, #tpu.memory_space<vmem>>, %arg6: memref<4x1xf32, #tpu.memory_space<vmem>>, %arg7: memref<16x1xf32, #tpu.memory_space<vmem>>, %arg8: memref<1x16x16xf32, #tpu.memory_space<vmem>>) attributes {dimension_semantics = [#tpu.dimension_semantics<parallel>], iteration_bounds = array<i64: 2>, scalar_prefetch = 0 : i64, scratch_operands = 0 : i64, tpu.core_type = #tpu.core_type<tc>, window_params = [{transform_indices = @transform_0, window_bounds = array<i64: 1, 8, 16>}, {pipeline_mode = #tpu.pipeline_mode<synchronous>, transform_indices = @transform_1, window_bounds = array<i64: 4, 8>}, {pipeline_mode = #tpu.pipeline_mode<synchronous>, transform_indices = @transform_2, window_bounds = array<i64: 4, 60>}, {pipeline_mode = #tpu.pipeline_mode<synchronous>, transform_indices = @transform_3, window_bounds = array<i64: 16, 12>}, {pipeline_mode = #tpu.pipeline_mode<synchronous>, transform_indices = @transform_4, window_bounds = array<i64: 4, 1>}, {pipeline_mode = #tpu.pipeline_mode<synchronous>, transform_indices = @transform_5, window_bounds = array<i64: 4, 1>}, {pipeline_mode = #tpu.pipeline_mode<synchronous>, transform_indices = @transform_6, window_bounds = array<i64: 16, 1>}, {transform_indices = @transform_7, window_bounds = array<i64: 1, 16, 16>}]} {
    %c0 = arith.constant 0 : index
    %c0_0 = arith.constant 0 : index
    %0 = vector.load %arg2[%c0, %c0_0] : memref<4x8xbf16, #tpu.memory_space<vmem>>, vector<4x8xbf16>
    %c0_1 = arith.constant 0 : index
    %c0_2 = arith.constant 0 : index
    %1 = vector.load %arg3[%c0_1, %c0_2] : memref<4x60xbf16, #tpu.memory_space<vmem>>, vector<4x60xbf16>
    %c0_3 = arith.constant 0 : index
    %c0_4 = arith.constant 0 : index
    %2 = vector.load %arg4[%c0_3, %c0_4] : memref<16x12xbf16, #tpu.memory_space<vmem>>, vector<16x12xbf16>
    %c0_5 = arith.constant 0 : index
    %c0_6 = arith.constant 0 : index
    %3 = vector.load %arg5[%c0_5, %c0_6] : memref<4x1xf32, #tpu.memory_space<vmem>>, vector<4x1xf32>
    %c0_7 = arith.constant 0 : index
    %c0_8 = arith.constant 0 : index
    %4 = vector.load %arg6[%c0_7, %c0_8] : memref<4x1xf32, #tpu.memory_space<vmem>>, vector<4x1xf32>
    %c0_9 = arith.constant 0 : index
    %c0_10 = arith.constant 0 : index
    %5 = vector.load %arg7[%c0_9, %c0_10] : memref<16x1xf32, #tpu.memory_space<vmem>>, vector<16x1xf32>
    %cst = arith.constant 0.000000e+00 : bf16
    %6 = vector.broadcast %cst : bf16 to vector<4x7xbf16>
    %c0_11 = arith.constant 0 : index
    %c0_12 = arith.constant 0 : index
    %c0_13 = arith.constant 0 : index
    %7 = vector.load %arg1[%c0_11, %c0_12, %c0_13] : memref<1x8x16xbf16, #tpu.memory_space<vmem>>, vector<1x8x16xbf16>
    %8 = vector.shape_cast %7 : vector<1x8x16xbf16> to vector<8x16xbf16>
    %cst_14 = arith.constant dense<0.000000e+00> : vector<4x16xf32>
    %9 = tpu.matmul %0, %8, %cst_14 {dimension_numbers = #tpu.dot_dimension_numbers<[1], [0], [0], [1], [0, 0, 1, 1], [], []>} : vector<4x8xbf16>, vector<8x16xbf16>, vector<4x16xf32> -> vector<4x16xf32>
    %10 = vector.broadcast %3 : vector<4x1xf32> to vector<4x16xf32>
    %11 = arith.addf %9, %10 : vector<4x16xf32>
    %cst_15 = arith.constant 0.000000e+00 : f32
    %12 = vector.broadcast %cst_15 : f32 to vector<4x16xf32>
    %13 = arith.maximumf %11, %12 : vector<4x16xf32>
    %14 = arith.truncf %13 : vector<4x16xf32> to vector<4x16xbf16>
    %15 = tpu.concatenate %6, %14, %6 in 1 : vector<4x7xbf16>, vector<4x16xbf16>, vector<4x7xbf16> -> vector<4x30xbf16>
    %16 = vector.extract_strided_slice %15 {offsets = [0, 0], sizes = [4, 16], strides = [1, 1]} : vector<4x30xbf16> to vector<4x16xbf16>
    %17 = vector.extract_strided_slice %15 {offsets = [0, 1], sizes = [4, 16], strides = [1, 1]} : vector<4x30xbf16> to vector<4x16xbf16>
    %18 = vector.extract_strided_slice %15 {offsets = [0, 2], sizes = [4, 16], strides = [1, 1]} : vector<4x30xbf16> to vector<4x16xbf16>
    %19 = vector.extract_strided_slice %15 {offsets = [0, 3], sizes = [4, 16], strides = [1, 1]} : vector<4x30xbf16> to vector<4x16xbf16>
    %20 = vector.extract_strided_slice %15 {offsets = [0, 4], sizes = [4, 16], strides = [1, 1]} : vector<4x30xbf16> to vector<4x16xbf16>
    %21 = vector.extract_strided_slice %15 {offsets = [0, 5], sizes = [4, 16], strides = [1, 1]} : vector<4x30xbf16> to vector<4x16xbf16>
    %22 = vector.extract_strided_slice %15 {offsets = [0, 6], sizes = [4, 16], strides = [1, 1]} : vector<4x30xbf16> to vector<4x16xbf16>
    %23 = vector.extract_strided_slice %15 {offsets = [0, 7], sizes = [4, 16], strides = [1, 1]} : vector<4x30xbf16> to vector<4x16xbf16>
    %24 = vector.extract_strided_slice %15 {offsets = [0, 8], sizes = [4, 16], strides = [1, 1]} : vector<4x30xbf16> to vector<4x16xbf16>
    %25 = vector.extract_strided_slice %15 {offsets = [0, 9], sizes = [4, 16], strides = [1, 1]} : vector<4x30xbf16> to vector<4x16xbf16>
    %26 = vector.extract_strided_slice %15 {offsets = [0, 10], sizes = [4, 16], strides = [1, 1]} : vector<4x30xbf16> to vector<4x16xbf16>
    %27 = vector.extract_strided_slice %15 {offsets = [0, 11], sizes = [4, 16], strides = [1, 1]} : vector<4x30xbf16> to vector<4x16xbf16>
    %28 = vector.extract_strided_slice %15 {offsets = [0, 12], sizes = [4, 16], strides = [1, 1]} : vector<4x30xbf16> to vector<4x16xbf16>
    %29 = vector.extract_strided_slice %15 {offsets = [0, 13], sizes = [4, 16], strides = [1, 1]} : vector<4x30xbf16> to vector<4x16xbf16>
    %30 = vector.extract_strided_slice %15 {offsets = [0, 14], sizes = [4, 16], strides = [1, 1]} : vector<4x30xbf16> to vector<4x16xbf16>
    %31 = tpu.concatenate %16, %17, %18, %19, %20, %21, %22, %23, %24, %25, %26, %27, %28, %29, %30 in 0 : vector<4x16xbf16>, vector<4x16xbf16>, vector<4x16xbf16>, vector<4x16xbf16>, vector<4x16xbf16>, vector<4x16xbf16>, vector<4x16xbf16>, vector<4x16xbf16>, vector<4x16xbf16>, vector<4x16xbf16>, vector<4x16xbf16>, vector<4x16xbf16>, vector<4x16xbf16>, vector<4x16xbf16>, vector<4x16xbf16> -> vector<60x16xbf16>
    %cst_16 = arith.constant dense<0.000000e+00> : vector<4x16xf32>
    %32 = tpu.matmul %1, %31, %cst_16 {dimension_numbers = #tpu.dot_dimension_numbers<[1], [0], [0], [1], [0, 0, 1, 1], [], []>} : vector<4x60xbf16>, vector<60x16xbf16>, vector<4x16xf32> -> vector<4x16xf32>
    %33 = vector.broadcast %4 : vector<4x1xf32> to vector<4x16xf32>
    %34 = arith.addf %32, %33 : vector<4x16xf32>
    %cst_17 = arith.constant 0.000000e+00 : f32
    %35 = vector.broadcast %cst_17 : f32 to vector<4x16xf32>
    %36 = arith.maximumf %34, %35 : vector<4x16xf32>
    %37 = arith.truncf %36 : vector<4x16xf32> to vector<4x16xbf16>
    %38 = tpu.concatenate %37, %8 in 0 : vector<4x16xbf16>, vector<8x16xbf16> -> vector<12x16xbf16>
    %cst_18 = arith.constant dense<0.000000e+00> : vector<16x16xf32>
    %39 = tpu.matmul %2, %38, %cst_18 {dimension_numbers = #tpu.dot_dimension_numbers<[1], [0], [0], [1], [0, 0, 1, 1], [], []>} : vector<16x12xbf16>, vector<12x16xbf16>, vector<16x16xf32> -> vector<16x16xf32>
    %40 = vector.broadcast %5 : vector<16x1xf32> to vector<16x16xf32>
    %41 = arith.addf %39, %40 : vector<16x16xf32>
    %cst_19 = arith.constant 0.000000e+00 : f32
    %42 = vector.broadcast %cst_19 : f32 to vector<16x16xf32>
    %43 = arith.maximumf %41, %42 : vector<16x16xf32>
    %c0_20 = arith.constant 0 : index
    %c0_21 = arith.constant 0 : index
    %c0_22 = arith.constant 0 : index
    %44 = vector.load %arg8[%c0_20, %c0_21, %c0_22] : memref<1x16x16xf32, #tpu.memory_space<vmem>>, vector<1x16x16xf32>
    %45 = vector.shape_cast %44 : vector<1x16x16xf32> to vector<16x16xf32>
    %46 = vector.shape_cast %43 : vector<16x16xf32> to vector<1x16x16xf32>
    tpu.vector_store %arg8[%c0_20, %c0_21, %c0_22], %46 {strides = array<i32>} : memref<1x16x16xf32, #tpu.memory_space<vmem>>, vector<1x16x16xf32>,
    return
  }
  func.func @transform_0(%arg0: i32) -> (i32, i32, i32) {
    %c0_i32 = arith.constant 0 : i32
    %c0_i32_0 = arith.constant 0 : i32
    %c0_i32_1 = arith.constant 0 : i32
    return %arg0, %c0_i32, %c0_i32_0 : i32, i32, i32
  }
  func.func @transform_1(%arg0: i32) -> (i32, i32) {
    %c0_i32 = arith.constant 0 : i32
    %c0_i32_0 = arith.constant 0 : i32
    %c0_i32_1 = arith.constant 0 : i32
    return %c0_i32, %c0_i32_0 : i32, i32
  }
  func.func @transform_2(%arg0: i32) -> (i32, i32) {
    %c0_i32 = arith.constant 0 : i32
    %c0_i32_0 = arith.constant 0 : i32
    %c0_i32_1 = arith.constant 0 : i32
    return %c0_i32, %c0_i32_0 : i32, i32
  }
  func.func @transform_3(%arg0: i32) -> (i32, i32) {
    %c0_i32 = arith.constant 0 : i32
    %c0_i32_0 = arith.constant 0 : i32
    %c0_i32_1 = arith.constant 0 : i32
    return %c0_i32, %c0_i32_0 : i32, i32
  }
  func.func @transform_4(%arg0: i32) -> (i32, i32) {
    %c0_i32 = arith.constant 0 : i32
    %c0_i32_0 = arith.constant 0 : i32
    %c0_i32_1 = arith.constant 0 : i32
    return %c0_i32, %c0_i32_0 : i32, i32
  }
  func.func @transform_5(%arg0: i32) -> (i32, i32) {
    %c0_i32 = arith.constant 0 : i32
    %c0_i32_0 = arith.constant 0 : i32
    %c0_i32_1 = arith.constant 0 : i32
    return %c0_i32, %c0_i32_0 : i32, i32
  }
  func.func @transform_6(%arg0: i32) -> (i32, i32) {
    %c0_i32 = arith.constant 0 : i32
    %c0_i32_0 = arith.constant 0 : i32
    %c0_i32_1 = arith.constant 0 : i32
    return %c0_i32, %c0_i32_0 : i32, i32
  }
  func.func @transform_7(%arg0: i32) -> (i32, i32, i32) {
    %c0_i32 = arith.constant 0 : i32
    %c0_i32_0 = arith.constant 0 : i32
    %c0_i32_1 = arith.constant 0 : i32
    return %arg0, %c0_i32, %c0_i32_0 : i32, i32, i32
  }
}

</mosaic_0001>

<llo_original>
// kernel: tpu_custom_call.1
$region0: #{tpu_custom_call.1}
  #allocation0 [shape = 'u32[]', space=smem, size = 0x4, offset = 0x4, fixed_abs, tag = 'smem constant byte address 0x4 - core index']
  #allocation1 [shape = 'u32[144,128]{1,0:T(1,128)}', space=vmem, size = 0x12000, scoped, tag = 'internal scratch']
  %s0 = inlined_call_operand.vmem [shape: bf16[2,8,16], index: 0, kind: input, shape index: {}]
  %s1 = inlined_call_operand.vmem [shape: bf16[4,8], index: 1, kind: input, shape index: {}]
  %s2 = inlined_call_operand.vmem [shape: bf16[4,60], index: 2, kind: input, shape index: {}]
  %s3 = inlined_call_operand.vmem [shape: bf16[16,12], index: 3, kind: input, shape index: {}]
  %s4 = inlined_call_operand.vmem [shape: f32[4,1], index: 4, kind: input, shape index: {}]
  %s5 = inlined_call_operand.vmem [shape: f32[4,1], index: 5, kind: input, shape index: {}]
  %s6 = inlined_call_operand.vmem [shape: f32[16,1], index: 6, kind: input, shape index: {}]
  %s7 = inlined_call_operand.hbm [shape: f32[2,16,16], index: 7, kind: output, shape index: {}]
  %s8 = sld [smem:[#allocation0]]
  $region61: #{tpu_custom_call.1} parent=0
    _
  %s10 = ssub.s32 1, %s8
  %s11 = scalar_select 0, %s10, %s8
  $region1: #{tpu_custom_call.1} parent=0
    #allocation2 [shape = 'u8[16384]{0}', space=vmem, size = 0x4000, scoped, tag = 'output window, operand 0']
    #allocation3 [shape = 's32[2]{0}', space=sflag, size = 0x8, scoped, tag = 'scoped memory for tpu_custom_call.1']
    %12 = vsyncpa [#allocation3], 0
    %s13 = scalar_lea.sflag [#allocation3], 1
    %14 = vsyncpa %s13, 0
    loop: start=0, step=1, limit=4
    $region2: #{tpu_custom_call.1} parent=1 // loop_pre_header
      _
    $region3: #{tpu_custom_call.1} parent=1 // loop_header
      %s16 = sphi 0, %s20
      %p17 = scmp.ge.s32.totalorder %s16, 4
      %s26 = sphi 0, %s28
      %s29 = sphi 0, %s26
      %s30 = sphi 0, %s29
      %s46 = sphi 0, %s30
      %s50 = sphi 0, %s50
      %s52 = sphi 0, %s50
      %s53 = sphi 0, %s52
      %s67 = sphi 0, %s53
      %s71 = sphi 0, %s71
      %s73 = sphi 0, %s71
      %s74 = sphi 0, %s73
      %s88 = sphi 0, %s74
      %s92 = sphi 0, %s92
      %s94 = sphi 0, %s92
      %s95 = sphi 0, %s94
      %s109 = sphi 0, %s95
      %s113 = sphi 0, %s113
      %s115 = sphi 0, %s113
      %s116 = sphi 0, %s115
      %s130 = sphi 0, %s116
      %s134 = sphi 0, %s134
      %s136 = sphi 0, %s134
      %s137 = sphi 0, %s136
      %s151 = sphi 0, %s137
      %s155 = sphi 0, %s155
      %s157 = sphi 0, %s155
      %s158 = sphi 0, %s157
      %s172 = sphi 0, %s158
      %s178 = sphi 0, %s180
      %s181 = sphi 0, %s178
      %s182 = sphi 0, %s181
      %s198 = sphi 0, %s182
    $region4: #{tpu_custom_call.1} parent=1 // loop_header_branch
      %19 = sbr.rel (%p17) target = $region8
    $region5: #{tpu_custom_call.1} parent=1 // loop_body
      %s21 = ssub.s32 %s16, 1
      %s22 = ssub.s32 %s16, 2
      %s23 = sadd.s32 %s16, 1
      %s24 = ssub.s32 %s16, %s23
      %p25 = scmp.eq.s32.totalorder %s24, 0
      %s27 = sadd.s32 %s26, 1
      %s28 = scalar_select %p25, %s26, %s27
      %p31 = pneg %p25
      %p32 = scmp.eq.s32.totalorder %s16, 1
      %p33 = por %p31, %p32
      %p34 = scmp.ne.s32.totalorder %s26, %s29
      %p35 = scmp.eq.s32.totalorder %s16, 0
      %p36 = por %p34, %p35
      %p37 = scmp.ne.s32.totalorder %s26, %s29
      %p38 = scmp.eq.s32.totalorder %s21, 1
      %p39 = por %p37, %p38
      %p40 = scmp.ne.s32.totalorder %s29, %s30
      %p41 = scmp.eq.s32.totalorder %s21, 0
      %p42 = por %p40, %p41
      %p43 = scmp.ne.s32.totalorder %s29, %s30
      %p44 = scmp.eq.s32.totalorder %s22, 1
      %p45 = por %p43, %p44
      %p47 = scmp.ne.s32.totalorder %s30, %s46
      %p48 = scmp.eq.s32.totalorder %s22, 0
      %p49 = por %p47, %p48
      %s51 = sadd.s32 %s50, 1
      %p54 = scmp.eq.s32.totalorder %s16, 1
      %p55 = scmp.ne.s32.totalorder %s50, %s52
      %p56 = scmp.eq.s32.totalorder %s16, 0
      %p57 = por %p55, %p56
      %p58 = scmp.ne.s32.totalorder %s50, %s52
      %p59 = scmp.eq.s32.totalorder %s21, 1
      %p60 = por %p58, %p59
      %p61 = scmp.ne.s32.totalorder %s52, %s53
      %p62 = scmp.eq.s32.totalorder %s21, 0
      %p63 = por %p61, %p62
      %p64 = scmp.ne.s32.totalorder %s52, %s53
      %p65 = scmp.eq.s32.totalorder %s22, 1
      %p66 = por %p64, %p65
      %p68 = scmp.ne.s32.totalorder %s53, %s67
      %p69 = scmp.eq.s32.totalorder %s22, 0
      %p70 = por %p68, %p69
      %s72 = sadd.s32 %s71, 1
      %p75 = scmp.eq.s32.totalorder %s16, 1
      %p76 = scmp.ne.s32.totalorder %s71, %s73
      %p77 = scmp.eq.s32.totalorder %s16, 0
      %p78 = por %p76, %p77
      %p79 = scmp.ne.s32.totalorder %s71, %s73
      %p80 = scmp.eq.s32.totalorder %s21, 1
      %p81 = por %p79, %p80
      %p82 = scmp.ne.s32.totalorder %s73, %s74
      %p83 = scmp.eq.s32.totalorder %s21, 0
      %p84 = por %p82, %p83
      %p85 = scmp.ne.s32.totalorder %s73, %s74
      %p86 = scmp.eq.s32.totalorder %s22, 1
      %p87 = por %p85, %p86
      %p89 = scmp.ne.s32.totalorder %s74, %s88
      %p90 = scmp.eq.s32.totalorder %s22, 0
      %p91 = por %p89, %p90
      %s93 = sadd.s32 %s92, 1
      %p96 = scmp.eq.s32.totalorder %s16, 1
      %p97 = scmp.ne.s32.totalorder %s92, %s94
      %p98 = scmp.eq.s32.totalorder %s16, 0
      %p99 = por %p97, %p98
      %p100 = scmp.ne.s32.totalorder %s92, %s94
      %p101 = scmp.eq.s32.totalorder %s21, 1
      %p102 = por %p100, %p101
      %p103 = scmp.ne.s32.totalorder %s94, %s95
      %p104 = scmp.eq.s32.totalorder %s21, 0
      %p105 = por %p103, %p104
      %p106 = scmp.ne.s32.totalorder %s94, %s95
      %p107 = scmp.eq.s32.totalorder %s22, 1
      %p108 = por %p106, %p107
      %p110 = scmp.ne.s32.totalorder %s95, %s109
      %p111 = scmp.eq.s32.totalorder %s22, 0
      %p112 = por %p110, %p111
      %s114 = sadd.s32 %s113, 1
      %p117 = scmp.eq.s32.totalorder %s16, 1
      %p118 = scmp.ne.s32.totalorder %s113, %s115
      %p119 = scmp.eq.s32.totalorder %s16, 0
      %p120 = por %p118, %p119
      %p121 = scmp.ne.s32.totalorder %s113, %s115
      %p122 = scmp.eq.s32.totalorder %s21, 1
      %p123 = por %p121, %p122
      %p124 = scmp.ne.s32.totalorder %s115, %s116
      %p125 = scmp.eq.s32.totalorder %s21, 0
      %p126 = por %p124, %p125
      %p127 = scmp.ne.s32.totalorder %s115, %s116
      %p128 = scmp.eq.s32.totalorder %s22, 1
      %p129 = por %p127, %p128
      %p131 = scmp.ne.s32.totalorder %s116, %s130
      %p132 = scmp.eq.s32.totalorder %s22, 0
      %p133 = por %p131, %p132
      %s135 = sadd.s32 %s134, 1
      %p138 = scmp.eq.s32.totalorder %s16, 1
      %p139 = scmp.ne.s32.totalorder %s134, %s136
      %p140 = scmp.eq.s32.totalorder %s16, 0
      %p141 = por %p139, %p140
      %p142 = scmp.ne.s32.totalorder %s134, %s136
      %p143 = scmp.eq.s32.totalorder %s21, 1
      %p144 = por %p142, %p143
      %p145 = scmp.ne.s32.totalorder %s136, %s137
      %p146 = scmp.eq.s32.totalorder %s21, 0
      %p147 = por %p145, %p146
      %p148 = scmp.ne.s32.totalorder %s136, %s137
      %p149 = scmp.eq.s32.totalorder %s22, 1
      %p150 = por %p148, %p149
      %p152 = scmp.ne.s32.totalorder %s137, %s151
      %p153 = scmp.eq.s32.totalorder %s22, 0
      %p154 = por %p152, %p153
      %s156 = sadd.s32 %s155, 1
      %p159 = scmp.eq.s32.totalorder %s16, 1
      %p160 = scmp.ne.s32.totalorder %s155, %s157
      %p161 = scmp.eq.s32.totalorder %s16, 0
      %p162 = por %p160, %p161
      %p163 = scmp.ne.s32.totalorder %s155, %s157
      %p164 = scmp.eq.s32.totalorder %s21, 1
      %p165 = por %p163, %p164
      %p166 = scmp.ne.s32.totalorder %s157, %s158
      %p167 = scmp.eq.s32.totalorder %s21, 0
      %p168 = por %p166, %p167
      %p169 = scmp.ne.s32.totalorder %s157, %s158
      %p170 = scmp.eq.s32.totalorder %s22, 1
      %p171 = por %p169, %p170
      %p173 = scmp.ne.s32.totalorder %s158, %s172
      %p174 = scmp.eq.s32.totalorder %s22, 0
      %p175 = por %p173, %p174
      %s176 = ssub.s32 %s16, %s23
      %p177 = scmp.eq.s32.totalorder %s176, 0
      %s179 = sadd.s32 %s178, 1
      %s180 = scalar_select %p177, %s178, %s179
      %p183 = pneg %p177
      %p184 = scmp.eq.s32.totalorder %s16, 1
      %p185 = por %p183, %p184
      %p186 = scmp.ne.s32.totalorder %s178, %s181
      %p187 = scmp.eq.s32.totalorder %s16, 0
      %p188 = por %p186, %p187
      %p189 = scmp.ne.s32.totalorder %s178, %s181
      %p190 = scmp.eq.s32.totalorder %s21, 1
      %p191 = por %p189, %p190
      %p192 = scmp.ne.s32.totalorder %s181, %s182
      %p193 = scmp.eq.s32.totalorder %s21, 0
      %p194 = por %p192, %p193
      %p195 = scmp.ne.s32.totalorder %s181, %s182
      %p196 = scmp.eq.s32.totalorder %s22, 1
      %p197 = por %p195, %p196
      %p199 = scmp.ne.s32.totalorder %s182, %s198
      %p200 = scmp.eq.s32.totalorder %s22, 0
      %p201 = por %p199, %p200
      %p202 = scmp.le.s32.totalorder 1, %s16
      %p203 = scmp.lt.s32.totalorder %s16, 3
      %p204 = pnand %p202, %p203
      %p205 = pneg %p204
      // Predicated region
      $region9: #{tpu_custom_call.1} parent=5 // pred_check
        _
      $region10: #{tpu_custom_call.1} parent=5 // pred_check_branch
        %207 = sbr.rel (%p204) target = $region12
      $region11: #{tpu_custom_call.1} parent=5 // pred_region
        %s208 = ssub.s32 %s16, 1
        // Predicated region
        $region13: #{tpu_custom_call.1} parent=11 // pred_check
          %p209 = pneg %p63
        $region14: #{tpu_custom_call.1} parent=11 // pred_check_branch
          %211 = sbr.rel (%p209) target = $region16
        $region15: #{tpu_custom_call.1} parent=11 // pred_region
          _
        $region16: #{tpu_custom_call.1} parent=11 // pred_fallthru
          _
        // Predicated region
        $region17: #{tpu_custom_call.1} parent=11 // pred_check
          %p212 = pneg %p84
        $region18: #{tpu_custom_call.1} parent=11 // pred_check_branch
          %214 = sbr.rel (%p212) target = $region20
        $region19: #{tpu_custom_call.1} parent=11 // pred_region
          _
        $region20: #{tpu_custom_call.1} parent=11 // pred_fallthru
          _
        // Predicated region
        $region21: #{tpu_custom_call.1} parent=11 // pred_check
          %p215 = pneg %p105
        $region22: #{tpu_custom_call.1} parent=11 // pred_check_branch
          %217 = sbr.rel (%p215) target = $region24
        $region23: #{tpu_custom_call.1} parent=11 // pred_region
          _
        $region24: #{tpu_custom_call.1} parent=11 // pred_fallthru
          _
        // Predicated region
        $region25: #{tpu_custom_call.1} parent=11 // pred_check
          %p218 = pneg %p126
        $region26: #{tpu_custom_call.1} parent=11 // pred_check_branch
          %220 = sbr.rel (%p218) target = $region28
        $region27: #{tpu_custom_call.1} parent=11 // pred_region
          _
        $region28: #{tpu_custom_call.1} parent=11 // pred_fallthru
          _
        // Predicated region
        $region29: #{tpu_custom_call.1} parent=11 // pred_check
          %p221 = pneg %p147
        $region30: #{tpu_custom_call.1} parent=11 // pred_check_branch
          %223 = sbr.rel (%p221) target = $region32
        $region31: #{tpu_custom_call.1} parent=11 // pred_region
          _
        $region32: #{tpu_custom_call.1} parent=11 // pred_fallthru
          _
        // Predicated region
        $region33: #{tpu_custom_call.1} parent=11 // pred_check
          %p224 = pneg %p168
        $region34: #{tpu_custom_call.1} parent=11 // pred_check_branch
          %226 = sbr.rel (%p224) target = $region36
        $region35: #{tpu_custom_call.1} parent=11 // pred_region
          _
        $region36: #{tpu_custom_call.1} parent=11 // pred_fallthru
          _
      $region12: #{tpu_custom_call.1} parent=5 // pred_fallthru
        _
      %p227 = scmp.lt.s32.totalorder %s16, 2
      // Predicated region
      $region37: #{tpu_custom_call.1} parent=5 // pred_check
        %p228 = pneg %p227
      $region38: #{tpu_custom_call.1} parent=5 // pred_check_branch
        %230 = sbr.rel (%p228) target = $region40
      $region39: #{tpu_custom_call.1} parent=5 // pred_region
        // Predicated region
        $region41: #{tpu_custom_call.1} parent=39 // pred_check
          %p231 = pneg %p36
        $region42: #{tpu_custom_call.1} parent=39 // pred_check_branch
          %233 = sbr.rel (%p231) target = $region44
        $region43: #{tpu_custom_call.1} parent=39 // pred_region
          %p234 = scmp.lt.s32.totalorder %s16, 1
          %s235 = scalar_select %p234, %s16, 1
          %s236 = smul.addr %s235, 4
          %s237 = scalar_lea.vmem %s0, %s236
        $region44: #{tpu_custom_call.1} parent=39 // pred_fallthru
          _
      $region40: #{tpu_custom_call.1} parent=5 // pred_fallthru
        _
      %p238 = scmp.le.s32.totalorder 1, %s16
      %p239 = scmp.lt.s32.totalorder %s16, 3
      %p240 = pnand %p238, %p239
      %p241 = pneg %p240
      // Predicated region
      $region45: #{tpu_custom_call.1} parent=5 // pred_check
        _
      $region46: #{tpu_custom_call.1} parent=5 // pred_check_branch
        %243 = sbr.rel (%p240) target = $region48
      $region47: #{tpu_custom_call.1} parent=5 // pred_region
        %s244 = ssub.s32 %s16, 1
        %p245 = scmp.lt.s32.totalorder %s21, 1
        %s246 = scalar_select %p245, %s21, 1
        %s247 = smul.addr %s246, 4
        %s248 = scalar_lea.vmem %s0, %s247
        %p249 = pneg %p42
        %p250 = pneg %p39
        %p251 = pneg %p63
        %p252 = pneg %p60
        %p253 = pneg %p84
        %p254 = pneg %p81
        %p255 = pneg %p105
        %p256 = pneg %p102
        %p257 = pneg %p126
        %p258 = pneg %p123
        %p259 = pneg %p147
        %p260 = pneg %p144
        %p261 = pneg %p168
        %p262 = pneg %p165
        %p263 = pneg %p194
        %p264 = pneg %p191
        %s265 = sand.u32 %s181, 1
        %s266 = scalar_lea.sflag [#allocation3], %s265
        %s267 = sand.u32 %s181, 1
        %s268 = smul.addr %s267, 16
        %s269 = scalar_lea.vmem [#allocation2], %s268
        %p270 = scmp.lt.s32.totalorder %s21, 1
        %s271 = scalar_select %p270, %s21, 1
        %s272 = smul.addr %s271, 4
        %s273 = scalar_lea.vmem %s0, %s272
        %v275 = vld [vmem:[%s1] sm:$0x3]
        %v276 = vld [vmem:[%s2] sm:$0x3]
        %v277 = vld [vmem:[%s3] sm:$0xf]
        %v278 = vld [vmem:[%s3 + $0x4] sm:$0xf]
        %v279 = vld [vmem:[%s4] sm:$0xf]
        %v280 = vld [vmem:[%s5] sm:$0xf]
        %v281 = vld [vmem:[%s6] sm:$0xff]
        %v282 = vld [vmem:[%s6 + $0x8] sm:$0xff]
        %v283 = vld [vmem:[%s273] sm:$0xf]
        %285 = vset.pattern.permute.xlu0 0
        %286 = vperm.xlu0 %285, %v279
        %v287 = vpop.permute.xlu0 %286
        %vm289 = vcmask 64512
        %v291 = vsel %vm289, %v275, 0
        %vm293 = vcmask 1043456
        %v295 = vsel %vm293, %v283, 0
        %297 = vmatprep.subr.bf16.mxu0 0
        %298 = vmatpush1.bf16.msra.mxu0 %v295
        %299 = vmatprep.subr.bf16.mxu0 0
        %300 = vmatpush1.bf16.msra.mxu0 0
        %301 = vmatprep.subr.bf16.mxu0 0
        %302 = vmatpush1.bf16.msra.mxu0 0
        %303 = vmatprep.subr.bf16.mxu0 0
        %304 = vmatpush1.bf16.msra.mxu0 0
        %305 = vmatprep.subr.bf16.mxu0 0
        %306 = vmatpush1.bf16.msra.mxu0 0
        %307 = vmatprep.subr.bf16.mxu0 0
        %308 = vmatpush1.bf16.msra.mxu0 0
        %309 = vmatprep.subr.bf16.mxu0 0
        %310 = vmatpush1.bf16.msra.mxu0 0
        %311 = vmatprep.subr.bf16.mxu0 0
        %312 = vmatpush1.bf16.msra.mxu0 0
        %313 = vmatprep.subr.bf16.mxu0 0
        %314 = vmatpush1.bf16.msra.mxu0 0
        %315 = vmatprep.subr.bf16.mxu0 0
        %316 = vmatpush1.bf16.msra.mxu0 0
        %317 = vmatprep.subr.bf16.mxu0 0
        %318 = vmatpush1.bf16.msra.mxu0 0
        %319 = vmatprep.subr.bf16.mxu0 0
        %320 = vmatpush1.bf16.msra.mxu0 0
        %321 = vmatprep.subr.bf16.mxu0 0
        %322 = vmatpush1.bf16.msra.mxu0 0
        %323 = vmatprep.subr.bf16.mxu0 0
        %324 = vmatpush1.bf16.msra.mxu0 0
        %325 = vmatprep.subr.bf16.mxu0 0
        %326 = vmatpush1.bf16.msra.mxu0 0
        %327 = vmatprep.subr.bf16.mxu0 0
        %328 = vmatpush1.bf16.msra.mxu0 0
        %329 = vmatprep.mubr.bf16.mxu0 0
        %330 = vmatmul.mubr.bf16.gmra.mrb[0].mxu0 %v291
        %v331 = vpop.f32.mrb[0].mxu0
        %v332 = vadd.f32 %v287, %v331
        %v333 = vpop.f32.mrb[0].mxu0
        %v334 = vpop.f32.mrb[0].mxu0
        %v335 = vpop.f32.mrb[0].mxu0
        %336 = vdwg.mxu0
        %v337 = vmax.f32 %v332, 0.0
        %v338 = vpack.c.bf16 %v337, %v337
        %340 = vrot.lane.b32.xlu0 %v338, 7
        %v341 = vpop.permute.xlu0 %340
        %vm342 = vcmask 56320
        %v345 = vsel %vm342, 0, %v341
        %vm346 = vcmask 187392
        %v347 = vsel %vm346, %v345, 0
        %v349 = vrot.slane %v347, 6
        %350 = vrot.lane.b32.xlu0 %v349, 127
        %v351 = vpop.permute.xlu0 %350
        %v352 = vrot.slane %v347, 4
        %353 = vrot.lane.b32.xlu0 %v352, 126
        %v354 = vpop.permute.xlu0 %353
        %v355 = vrot.slane %v347, 2
        %356 = vrot.lane.b32.xlu0 %v355, 125
        %v357 = vpop.permute.xlu0 %356
        %358 = vrot.lane.b32.xlu0 %v347, 124
        %v359 = vpop.permute.xlu0 %358
        %360 = vrot.lane.b32.xlu0 %v349, 123
        %v361 = vpop.permute.xlu0 %360
        %362 = vrot.lane.b32.xlu0 %v352, 122
        %v363 = vpop.permute.xlu0 %362
        %364 = vrot.lane.b32.xlu0 %v355, 121
        %v365 = vpop.permute.xlu0 %364
        %366 = vrot.lane.b32.xlu0 %v347, 120
        %v367 = vpop.permute.xlu0 %366
        %368 = vrot.lane.b32.xlu0 %v349, 119
        %v369 = vpop.permute.xlu0 %368
        %370 = vrot.lane.b32.xlu0 %v352, 118
        %v371 = vpop.permute.xlu0 %370
        %372 = vrot.lane.b32.xlu0 %v355, 117
        %v373 = vpop.permute.xlu0 %372
        %374 = vrot.lane.b32.xlu0 %v347, 116
        %v375 = vpop.permute.xlu0 %374
        %376 = vrot.lane.b32.xlu0 %v349, 115
        %v377 = vpop.permute.xlu0 %376
        %378 = vrot.lane.b32.xlu0 %v352, 114
        %v379 = vpop.permute.xlu0 %378
        %vm380 = vcmask 1041408
        %v382 = vsel %vm380, %v347, %v351
        %v384 = vsel %vm293, %v382, %v354
        %vm385 = vcmask 1045504
        %v387 = vsel %vm385, %v384, %v357
        %v391 = vsel %vm380, %v359, %v361
        %v393 = vsel %vm293, %v391, %v363
        %v395 = vsel %vm385, %v393, %v365
        %v399 = vsel %vm380, %v367, %v369
        %v401 = vsel %vm293, %v399, %v371
        %v403 = vsel %vm385, %v401, %v373
        %v407 = vsel %vm380, %v375, %v377
        %v409 = vsel %vm293, %v407, %v379
        %411 = vset.pattern.permute.xlu0 0
        %412 = vperm.xlu0 %411, %v280
        %v413 = vpop.permute.xlu0 %412
        %vm415 = vcmask 490496
        %v417 = vsel %vm415, %v276, 0
        %v419 = vsel %vm385, %v409, 0
        %421 = vmatprep.subr.bf16.mxu0 0
        %422 = vmatpush1.bf16.msra.mxu0 %v387
        %423 = vmatprep.subr.bf16.mxu0 0
        %424 = vmatpush1.bf16.msra.mxu0 %v395
        %425 = vmatprep.subr.bf16.mxu0 0
        %426 = vmatpush1.bf16.msra.mxu0 %v403
        %427 = vmatprep.subr.bf16.mxu0 0
        %428 = vmatpush1.bf16.msra.mxu0 %v419
        %429 = vmatprep.subr.bf16.mxu0 0
        %430 = vmatpush1.bf16.msra.mxu0 0
        %431 = vmatprep.subr.bf16.mxu0 0
        %432 = vmatpush1.bf16.msra.mxu0 0
        %433 = vmatprep.subr.bf16.mxu0 0
        %434 = vmatpush1.bf16.msra.mxu0 0
        %435 = vmatprep.subr.bf16.mxu0 0
        %436 = vmatpush1.bf16.msra.mxu0 0
        %437 = vmatprep.subr.bf16.mxu0 0
        %438 = vmatpush1.bf16.msra.mxu0 0
        %439 = vmatprep.subr.bf16.mxu0 0
        %440 = vmatpush1.bf16.msra.mxu0 0
        %441 = vmatprep.subr.bf16.mxu0 0
        %442 = vmatpush1.bf16.msra.mxu0 0
        %443 = vmatprep.subr.bf16.mxu0 0
        %444 = vmatpush1.bf16.msra.mxu0 0
        %445 = vmatprep.subr.bf16.mxu0 0
        %446 = vmatpush1.bf16.msra.mxu0 0
        %447 = vmatprep.subr.bf16.mxu0 0
        %448 = vmatpush1.bf16.msra.mxu0 0
        %449 = vmatprep.subr.bf16.mxu0 0
        %450 = vmatpush1.bf16.msra.mxu0 0
        %451 = vmatprep.subr.bf16.mxu0 0
        %452 = vmatpush1.bf16.msra.mxu0 0
        %453 = vmatprep.mubr.bf16.mxu0 0
        %454 = vmatmul.mubr.bf16.gmra.mrb[0].mxu0 %v417
        %v455 = vpop.f32.mrb[0].mxu0
        %v456 = vadd.f32 %v413, %v455
        %v457 = vpop.f32.mrb[0].mxu0
        %v458 = vpop.f32.mrb[0].mxu0
        %v459 = vpop.f32.mrb[0].mxu0
        %460 = vdwg.mxu0
        %v461 = vmax.f32 %v456, 0.0
        %v462 = vpack.c.bf16 %v461, %v461
        %v464 = vunpack.c.l.b16 %v283
        %v465 = vpack.c.b16 %v464, %v464
        %v466 = vrot.slane %v465, 6
        %v469 = vsel %vm380, %v462, %v466
        %471 = vset.pattern.permute.xlu0 0
        %472 = vperm.xlu0 %471, %v281
        %v473 = vpop.permute.xlu0 %472
        %476 = vset.pattern.permute.xlu0 0
        %477 = vperm.xlu0 %476, %v282
        %v478 = vpop.permute.xlu0 %477
        %v482 = vunpack.c.l.b16 %v277
        %v483 = vunpack.c.l.b16 %v278
        %v484 = vpack.c.b16 %v483, %v482
        %vm485 = vcmask 97280
        %v487 = vsel %vm485, %v484, 0
        %v489 = vsel %vm385, %v469, 0
        %491 = vmatprep.subr.bf16.mxu0 0
        %492 = vmatpush1.bf16.msra.mxu0 %v489
        %493 = vmatprep.subr.bf16.mxu0 0
        %494 = vmatpush1.bf16.msra.mxu0 0
        %495 = vmatprep.subr.bf16.mxu0 0
        %496 = vmatpush1.bf16.msra.mxu0 0
        %497 = vmatprep.subr.bf16.mxu0 0
        %498 = vmatpush1.bf16.msra.mxu0 0
        %499 = vmatprep.subr.bf16.mxu0 0
        %500 = vmatpush1.bf16.msra.mxu0 0
        %501 = vmatprep.subr.bf16.mxu0 0
        %502 = vmatpush1.bf16.msra.mxu0 0
        %503 = vmatprep.subr.bf16.mxu0 0
        %504 = vmatpush1.bf16.msra.mxu0 0
        %505 = vmatprep.subr.bf16.mxu0 0
        %506 = vmatpush1.bf16.msra.mxu0 0
        %507 = vmatprep.subr.bf16.mxu0 0
        %508 = vmatpush1.bf16.msra.mxu0 0
        %509 = vmatprep.subr.bf16.mxu0 0
        %510 = vmatpush1.bf16.msra.mxu0 0
        %511 = vmatprep.subr.bf16.mxu0 0
        %512 = vmatpush1.bf16.msra.mxu0 0
        %513 = vmatprep.subr.bf16.mxu0 0
        %514 = vmatpush1.bf16.msra.mxu0 0
        %515 = vmatprep.subr.bf16.mxu0 0
        %516 = vmatpush1.bf16.msra.mxu0 0
        %517 = vmatprep.subr.bf16.mxu0 0
        %518 = vmatpush1.bf16.msra.mxu0 0
        %519 = vmatprep.subr.bf16.mxu0 0
        %520 = vmatpush1.bf16.msra.mxu0 0
        %521 = vmatprep.subr.bf16.mxu0 0
        %522 = vmatpush1.bf16.msra.mxu0 0
        %523 = vmatprep.mubr.bf16.mxu0 0
        %524 = vmatmul.mubr.bf16.gmra.mrb[0].mxu0 %v487
        %v525 = vpop.f32.mrb[0].mxu0
        %v526 = vadd.f32 %v473, %v525
        %v527 = vpop.f32.mrb[0].mxu0
        %v528 = vpop.f32.mrb[0].mxu0
        %v529 = vadd.f32 %v478, %v528
        %v530 = vpop.f32.mrb[0].mxu0
        %531 = vdwg.mxu0
        %v532 = vmax.f32 %v526, 0.0
        %v533 = vmax.f32 %v529, 0.0
        %vm534 = vcmask 130048
        %535 = vst.msk [vmem:[%s269] sm:$0xff] %vm534, %v532
        %536 = vst.msk [vmem:[%s269 + $0x8] sm:$0xff] %vm534, %v533
        %s537 = sand.u32 %s181, 1
        %s538 = scalar_lea.sflag [#allocation3], %s537
        %s539 = sand.u32 %s181, 1
        %s540 = smul.addr %s539, 16
        %s541 = scalar_lea.vmem [#allocation2], %s540
        // Predicated region
        $region49: #{tpu_custom_call.1} parent=47 // pred_check
          %p542 = pneg %p191
        $region50: #{tpu_custom_call.1} parent=47 // pred_check_branch
          %544 = sbr.rel (%p542) target = $region52
        $region51: #{tpu_custom_call.1} parent=47 // pred_region
          %s546 = ssub.s32 256, 256
          %547 = vsyncadd %s538, %s546
          %s548 = smul.addr %s21, 2
          %s549 = smul.addr %s548, 128
          %s550 = scalar_lea.hbm %s7, %s549
          %s551 = sshll.u32 %s541, 4
          %s552 = int_to_ptr.vmem [resolvable:$true] %s551
          %557 = dma.vmem_to_hbm [thread:$0]  %s552, 256, %s550, %s538, 128, 128, 8
        $region52: #{tpu_custom_call.1} parent=47 // pred_fallthru
          _
      $region48: #{tpu_custom_call.1} parent=5 // pred_fallthru
        _
      %p558 = scmp.le.s32.totalorder 2, %s16
      // Predicated region
      $region53: #{tpu_custom_call.1} parent=5 // pred_check
        %p559 = pneg %p558
      $region54: #{tpu_custom_call.1} parent=5 // pred_check_branch
        %561 = sbr.rel (%p559) target = $region56
      $region55: #{tpu_custom_call.1} parent=5 // pred_region
        %s562 = ssub.s32 %s16, 2
        // Predicated region
        $region57: #{tpu_custom_call.1} parent=55 // pred_check
          %p563 = pneg %p197
        $region58: #{tpu_custom_call.1} parent=55 // pred_check_branch
          %565 = sbr.rel (%p563) target = $region60
        $region59: #{tpu_custom_call.1} parent=55 // pred_region
          %s566 = sand.u32 %s182, 1
          %s567 = scalar_lea.sflag [#allocation3], %s566
          %s568 = sand.u32 %s182, 1
          %s569 = smul.addr %s568, 16
          %s570 = scalar_lea.vmem [#allocation2], %s569
          %571 = dma.done %s567, 256
        $region60: #{tpu_custom_call.1} parent=55 // pred_fallthru
          _
      $region56: #{tpu_custom_call.1} parent=5 // pred_fallthru
        _
    $region6: #{tpu_custom_call.1} parent=1 // loop_footer
      %s20 = sadd.s32 1, %s16
    $region7: #{tpu_custom_call.1} parent=1 // loop_footer_branch
      %15 = sbr.rel target = $region3
    $region8: #{tpu_custom_call.1} parent=1 // loop_exit
      _
    %572 = vsyncpa [#allocation3], 1
    %s573 = scalar_lea.sflag [#allocation3], 1
    %574 = vsyncpa %s573, 1

</llo_original>
